<compile_context>
chip_gen: v5e
topology: v5e:2x2
jax: 0.10.0
libtpu: 0.0.40
codegen_flags: <defaults>
</compile_context>

<pallas_src>
import jax
import jax.numpy as jnp
from jax.experimental import pallas as pl
from jax.experimental.pallas import tpu as pltpu


LANE = 128              # last dim of every block padded to this (lane-dense stores)
SUBLANE = 8             # f32 sublane quantum for the batch (streamed) dim
MIN_PARALLEL_ROWS = 256 # don't split tiles below this just to feed a 2nd TensorCore


def _round_up(n, m):
    return ((n + m - 1) // m) * m


def _cdiv(a, b):
    return (a + b - 1) // b


def _pad2d(a, rows, cols):
    r, c = a.shape
    if (r, c) == (rows, cols):
        return a
    return jnp.pad(a, ((0, rows - r), (0, cols - c)))


# ----------------------------------------------------------------------------
# Fused chain kernel:  h_{l+1} = sigmoid(h_l @ W_l + b_l),  l = 0..L-1
# Weights, biases and intermediates stay VMEM-resident; only the input batch
# tile streams in and the final (plus optionally one tapped) activation
# streams out.
# ----------------------------------------------------------------------------
def _make_chain_kernel(n_layers, tap):
    def kernel(*refs):
        if tap is None:
            tap_ref, out_ref = None, refs[1 + 2 * n_layers]
        else:
            tap_ref, out_ref = refs[1 + 2 * n_layers], refs[2 + 2 * n_layers]

        h = refs[0][...]                              # f32 batch tile
        for l in range(n_layers):
            w = refs[1 + 2 * l][...]                  # pre-padded, pre-cast (bf16/f32)
            b = refs[2 + 2 * l][...]                  # f32 bias row (1, D)
            z = jnp.dot(h.astype(w.dtype), w,
                        preferred_element_type=jnp.float32) + b
            # Exact sigmoid with a single EUP op: sigmoid(z) = 0.5 + 0.5*tanh(z/2)
            h = 0.5 + 0.5 * jnp.tanh(0.5 * z)
            if tap is not None and (l + 1) == tap:
                tap_ref[...] = h.astype(tap_ref.dtype)
        out_ref[...] = h.astype(out_ref.dtype)

    return kernel


def _vmem_limit_bytes(padded_layers, tb, dims_p, tap, weight_bufs):
    """Scoped-VMEM budget from the actual footprint (defaults are 16/32 MiB)."""
    weight_bytes = sum(w.size * w.dtype.itemsize + b.size * b.dtype.itemsize
                       for w, b in padded_layers)
    d_max = max(dims_p)
    stream_in = 2 * tb * dims_p[0] * 4                  # double-buffered input tile
    stream_out = 2 * tb * dims_p[-1] * 4
    if tap is not None:
        stream_out += 2 * tb * dims_p[tap] * 4
    act_scratch = 4 * tb * d_max * 4                    # headroom for live h / z temporaries
    estimate = weight_bufs * weight_bytes + stream_in + stream_out + act_scratch
    try:
        cap = int(pltpu.get_tpu_info().vmem_capacity_bytes)
    except Exception:
        cap = 64 * 1024 * 1024                          # assume v7x (most conservative)
    return int(min(int(0.75 * cap), max(32 * 1024 * 1024, 2 * estimate)))


def fused_chain(x, padded_layers, true_dims, tap=None, tile_b=512):
    """Apply sigmoid(h @ W + b) for each pre-padded (W, b) in `padded_layers`,
    all fused inside ONE pallas_call.  `true_dims` = [d0, d1, ..., dL] are the
    unpadded feature widths (used only for the final slices).  If `tap` is
    given (1 <= tap <= L), also returns the activation after `tap` layers:
    (h_tap, h_final)."""
    B, D0 = x.shape
    n_layers = len(padded_layers)
    assert len(true_dims) == n_layers + 1 and D0 == true_dims[0]

    dims_p = [padded_layers[0][0].shape[0]] + [w.shape[1] for w, _ in padded_layers]
    for l, (w, b) in enumerate(padded_layers):
        assert w.shape == (dims_p[l], dims_p[l + 1])
        assert b.shape == (1, dims_p[l + 1])

    # Batch tiling: choose the number of tiles so padding never balloons
    # (e.g. B=260 -> 272 rows, not 512) and split a single oversized tile in
    # two so both v7x TensorCores get work on the "parallel" batch axis.
    B_su = _round_up(B, SUBLANE)
    n_tiles = _cdiv(B_su, tile_b)
    if n_tiles == 1 and B_su >= 2 * MIN_PARALLEL_ROWS:
        n_tiles = 2
    tb = _round_up(_cdiv(B_su, n_tiles), SUBLANE)
    B_p = n_tiles * tb

    # Only the runtime batch is padded per call; weights were padded at init.
    # Padded lanes hold sigmoid(0)=0.5 internally but are multiplied by zero
    # weight rows in the next layer and sliced off at the end, so they never
    # contaminate real lanes.
    x_p = x.astype(jnp.float32)
    if (B_p, dims_p[0]) != (B, D0):
        x_p = jnp.pad(x_p, ((0, B_p - B), (0, dims_p[0] - D0)))

    flat_inputs = [x_p]
    for w, b in padded_layers:
        flat_inputs += [w, b]

    out_struct = jax.ShapeDtypeStruct((B_p, dims_p[-1]), jnp.float32)
    out_spec = pl.BlockSpec((tb, dims_p[-1]), lambda i: (i, 0))
    if tap is None:
        out_shape, out_specs = out_struct, out_spec
    else:
        assert 1 <= tap <= n_layers
        tap_struct = jax.ShapeDtypeStruct((B_p, dims_p[tap]), jnp.float32)
        tap_spec = pl.BlockSpec((tb, dims_p[tap]), lambda i: (i, 0))
        out_shape, out_specs = (tap_struct, out_struct), (tap_spec, out_spec)

    def build_and_run(single_buffer_weights):
        wkw = dict(pipeline_mode=pl.Buffered(1)) if single_buffer_weights else {}
        in_specs = [pl.BlockSpec((tb, dims_p[0]), lambda i: (i, 0))]
        for l in range(n_layers):
            # Constant index maps: weights/biases are DMA'd once and stay
            # VMEM-resident across every batch tile of the grid.
            in_specs.append(pl.BlockSpec((dims_p[l], dims_p[l + 1]),
                                         lambda i: (0, 0), **wkw))
            in_specs.append(pl.BlockSpec((1, dims_p[l + 1]),
                                         lambda i: (0, 0), **wkw))
        weight_bufs = 1 if single_buffer_weights else 2
        vmem_limit = _vmem_limit_bytes(padded_layers, tb, dims_p, tap, weight_bufs)
        call = pl.pallas_call(
            _make_chain_kernel(n_layers, tap),
            out_shape=out_shape,
            grid=(n_tiles,),
            in_specs=in_specs,
            out_specs=out_specs,
            compiler_params=pltpu.CompilerParams(
                dimension_semantics=("parallel",),
                vmem_limit_bytes=vmem_limit),
        )
        return call(*flat_inputs)

    try:
        # Preferred: single-buffered (constant-index) weight specs.
        result = jax.block_until_ready(build_and_run(True))
    except Exception:
        # Fallback for builds that reject pipeline_mode=pl.Buffered(1):
        # default double-buffered weight specs (2x resident weight VMEM).
        result = build_and_run(False)

    if tap is None:
        return result[:B, :true_dims[-1]]
    tap_out, final_out = result
    return tap_out[:B, :true_dims[tap]], final_out[:B, :true_dims[-1]]


# ----------------------------------------------------------------------------
# Parameter init + one-time preparation (pad + cast happen ONCE, not per call)
# ----------------------------------------------------------------------------
def init_sae_params(key, sae_size):
    """One (enc_w, enc_b, dec_w, dec_b) tuple per AutoEncoder layer (raw)."""
    params = []
    for i in range(1, len(sae_size)):
        d_in, d_out = sae_size[i - 1], sae_size[i]
        key, k1, k2, k3, k4 = jax.random.split(key, 5)
        params.append((
            jax.random.normal(k1, (d_in, d_out), jnp.float32) * 0.1,   # enc_w
            jax.random.normal(k2, (1, d_out), jnp.float32) * 0.1,      # enc_b
            jax.random.normal(k3, (d_out, d_in), jnp.float32) * 0.1,   # dec_w
            jax.random.normal(k4, (1, d_in), jnp.float32) * 0.1,       # dec_b
        ))
    return params


def prepare_sae_params(params, compute_dtype=jnp.bfloat16):
    """Pad every weight/bias to lane-dense shapes and cast weights to the MXU
    compute dtype ONCE (default bf16: fast MXU path on v6e/v7x, native on v5e).
    Biases stay f32 because the epilogue is f32.  Returns (padded, sizes)."""
    sizes = [params[0][0].shape[0]] + [p[0].shape[1] for p in params]
    padded = []
    for enc_w, enc_b, dec_w, dec_b in params:
        d_in, d_out = enc_w.shape
        d_in_p, d_out_p = _round_up(d_in, LANE), _round_up(d_out, LANE)
        padded.append((
            _pad2d(enc_w, d_in_p, d_out_p).astype(compute_dtype),
            _pad2d(enc_b, 1, d_out_p).astype(jnp.float32),
            _pad2d(dec_w, d_out_p, d_in_p).astype(compute_dtype),
            _pad2d(dec_b, 1, d_in_p).astype(jnp.float32),
        ))
    padded = jax.block_until_ready(padded)   # materialize: no pad/cast on hot path
    return padded, sizes


# ----------------------------------------------------------------------------
# StackedAutoEncoder glue (plain JAX orchestration; kernel count: 1 per call)
# ----------------------------------------------------------------------------
def stacked_autoencoder_forward(prepared, X, NoL=0, PreTrain=False, tile_b=512):
    """Mirrors StackedAutoEncoder.forward.
    # TODO(synk): requires_grad freezing/unfreezing is training-only
    # bookkeeping; it is a no-op for the forward pass and has no Pallas
    # equivalent.
    """
    padded_params, sizes = prepared
    if PreTrain is True:
        if NoL == 0:
            enc_w, enc_b, dec_w, dec_b = padded_params[0]
            out = fused_chain(X, [(enc_w, enc_b), (dec_w, dec_b)],
                              [sizes[0], sizes[1], sizes[0]], tile_b=tile_b)
            return X, out
        # Frozen encoder chain + full AE at layer NoL, all in ONE fused kernel;
        # the activation after the NoL frozen encoders is tapped out.
        layers = [(p[0], p[1]) for p in padded_params[:NoL]]
        dims = list(sizes[:NoL + 1])
        enc_w, enc_b, dec_w, dec_b = padded_params[NoL]
        layers += [(enc_w, enc_b), (dec_w, dec_b)]
        dims += [sizes[NoL + 1], sizes[NoL]]
        inputs, out = fused_chain(X, layers, dims, tap=NoL, tile_b=tile_b)
        return inputs, out
    # PreTrain=False: chain every encoder (rep=True) in ONE fused kernel.
    layers = [(p[0], p[1]) for p in padded_params]
    return fused_chain(X, layers, list(sizes), tile_b=tile_b)


# ----------------------------------------------------------------------------
# Pure-JAX reference (exact sigmoid, f32) for correctness checking
# ----------------------------------------------------------------------------
def _ref_linear_sigmoid(x, w, b):
    return jax.nn.sigmoid(x @ w + b)


def _ref_forward(params, X, NoL=0, PreTrain=False):
    out = X
    if PreTrain:
        if NoL == 0:
            enc_w, enc_b, dec_w, dec_b = params[0]
            h = _ref_linear_sigmoid(out, enc_w, enc_b)
            return out, _ref_linear_sigmoid(h, dec_w, dec_b)
        for i in range(NoL):
            enc_w, enc_b, _, _ = params[i]
            out = _ref_linear_sigmoid(out, enc_w, enc_b)
        inputs = out
        enc_w, enc_b, dec_w, dec_b = params[NoL]
        h = _ref_linear_sigmoid(out, enc_w, enc_b)
        return inputs, _ref_linear_sigmoid(h, dec_w, dec_b)
    for enc_w, enc_b, _, _ in params:
        out = _ref_linear_sigmoid(out, enc_w, enc_b)
    return out


# ----------------------------------------------------------------------------
# Main
# ----------------------------------------------------------------------------
if __name__ == "__main__":
    # cfg.SAE_size — stacked autoencoder layer widths
    SAE_SIZE = [32, 64, 48, 16]
    BATCH = 8

    key = jax.random.PRNGKey(0)
    key, kx = jax.random.split(key)
    X = jax.random.normal(kx, (BATCH, SAE_SIZE[0]), jnp.float32)
    params = init_sae_params(key, SAE_SIZE)

    # Pad + cast once, up front (never on the forward hot path).
    prepared_f32 = prepare_sae_params(params, compute_dtype=jnp.float32)
    prepared_bf16 = prepare_sae_params(params)   # default bf16 MXU path (v6e/v7x)

    TOL_F32 = dict(atol=2e-3, rtol=2e-3)
    TOL_BF16 = dict(atol=2e-2, rtol=2e-2)

    # Main path: PreTrain=False -> chain all encoders in one fused kernel.
    ref = _ref_forward(params, X, NoL=0, PreTrain=False)
    out = jax.block_until_ready(stacked_autoencoder_forward(prepared_f32, X))
    assert out.shape == (BATCH, SAE_SIZE[-1])
    assert jnp.allclose(out, ref, **TOL_F32)
    out_bf16 = jax.block_until_ready(stacked_autoencoder_forward(prepared_bf16, X))
    assert jnp.allclose(out_bf16, ref, **TOL_BF16)

    # Pretrain path, layer 0 (full AE only).
    in0, rec0 = stacked_autoencoder_forward(prepared_f32, X, NoL=0, PreTrain=True)
    rec0 = jax.block_until_ready(rec0)
    rin0, rrec0 = _ref_forward(params, X, NoL=0, PreTrain=True)
    assert jnp.allclose(in0, rin0, **TOL_F32)
    assert jnp.allclose(rec0, rrec0, **TOL_F32)

    # Pretrain path, layer 1 (frozen encoder chain + full AE, single fused call).
    in1, rec1 = stacked_autoencoder_forward(prepared_f32, X, NoL=1, PreTrain=True)
    rec1 = jax.block_until_ready(rec1)
    rin1, rrec1 = _ref_forward(params, X, NoL=1, PreTrain=True)
    assert jnp.allclose(in1, rin1, **TOL_F32)
    assert jnp.allclose(rec1, rrec1, **TOL_F32)

    # Multi-tile grid path: batch that is not a tile multiple (20 rows, tile 8).
    key, kx2 = jax.random.split(key)
    X2 = jax.random.normal(kx2, (20, SAE_SIZE[0]), jnp.float32)
    ref2 = _ref_forward(params, X2)
    out2 = jax.block_until_ready(
        stacked_autoencoder_forward(prepared_f32, X2, tile_b=8))
    assert out2.shape == (20, SAE_SIZE[-1])
    assert jnp.allclose(out2, ref2, **TOL_F32)

    print("KERNEL_OK")
</pallas_src>

<mosaic_0001>
module attributes {stable_mosaic.version = 11 : i64} {
  func.func @kernel(%arg0: i32, %arg1: memref<8x128xf32, #tpu.memory_space<vmem>>, %arg2: memref<128x128xf32, #tpu.memory_space<vmem>>, %arg3: memref<1x128xf32, #tpu.memory_space<vmem>>, %arg4: memref<128x128xf32, #tpu.memory_space<vmem>>, %arg5: memref<1x128xf32, #tpu.memory_space<vmem>>, %arg6: memref<128x128xf32, #tpu.memory_space<vmem>>, %arg7: memref<1x128xf32, #tpu.memory_space<vmem>>, %arg8: memref<8x128xf32, #tpu.memory_space<vmem>>) attributes {dimension_semantics = [#tpu.dimension_semantics<parallel>], iteration_bounds = array<i64: 1>, scalar_prefetch = 0 : i64, scratch_operands = 0 : i64, tpu.core_type = #tpu.core_type<tc>, window_params = [{transform_indices = @transform_0, window_bounds = array<i64: 8, 128>}, {pipeline_mode = #tpu.pipeline_mode<synchronous>, transform_indices = @transform_1, window_bounds = array<i64: 128, 128>}, {pipeline_mode = #tpu.pipeline_mode<synchronous>, transform_indices = @transform_2, window_bounds = array<i64: 1, 128>}, {pipeline_mode = #tpu.pipeline_mode<synchronous>, transform_indices = @transform_3, window_bounds = array<i64: 128, 128>}, {pipeline_mode = #tpu.pipeline_mode<synchronous>, transform_indices = @transform_4, window_bounds = array<i64: 1, 128>}, {pipeline_mode = #tpu.pipeline_mode<synchronous>, transform_indices = @transform_5, window_bounds = array<i64: 128, 128>}, {pipeline_mode = #tpu.pipeline_mode<synchronous>, transform_indices = @transform_6, window_bounds = array<i64: 1, 128>}, {transform_indices = @transform_7, window_bounds = array<i64: 8, 128>}]} {
    %c0 = arith.constant 0 : index
    %c0_0 = arith.constant 0 : index
    %0 = vector.load %arg1[%c0, %c0_0] : memref<8x128xf32, #tpu.memory_space<vmem>>, vector<8x128xf32>
    %c0_1 = arith.constant 0 : index
    %c0_2 = arith.constant 0 : index
    %1 = vector.load %arg2[%c0_1, %c0_2] : memref<128x128xf32, #tpu.memory_space<vmem>>, vector<128x128xf32>
    %c0_3 = arith.constant 0 : index
    %c0_4 = arith.constant 0 : index
    %2 = vector.load %arg3[%c0_3, %c0_4] : memref<1x128xf32, #tpu.memory_space<vmem>>, vector<1x128xf32>
    %cst = arith.constant dense<0.000000e+00> : vector<8x128xf32>
    %3 = tpu.matmul %0, %1, %cst {dimension_numbers = #tpu.dot_dimension_numbers<[1], [0], [0], [1], [0, 0, 1, 1], [], []>} : vector<8x128xf32>, vector<128x128xf32>, vector<8x128xf32> -> vector<8x128xf32>
    %4 = vector.broadcast %2 : vector<1x128xf32> to vector<8x128xf32>
    %5 = arith.addf %3, %4 : vector<8x128xf32>
    %cst_5 = arith.constant 5.000000e-01 : f32
    %6 = vector.broadcast %cst_5 : f32 to vector<8x128xf32>
    %7 = arith.mulf %6, %5 : vector<8x128xf32>
    %8 = math.tanh %7 : vector<8x128xf32>
    %cst_6 = arith.constant 5.000000e-01 : f32
    %9 = vector.broadcast %cst_6 : f32 to vector<8x128xf32>
    %10 = arith.mulf %9, %8 : vector<8x128xf32>
    %cst_7 = arith.constant 5.000000e-01 : f32
    %11 = vector.broadcast %cst_7 : f32 to vector<8x128xf32>
    %12 = arith.addf %11, %10 : vector<8x128xf32>
    %c0_8 = arith.constant 0 : index
    %c0_9 = arith.constant 0 : index
    %13 = vector.load %arg4[%c0_8, %c0_9] : memref<128x128xf32, #tpu.memory_space<vmem>>, vector<128x128xf32>
    %c0_10 = arith.constant 0 : index
    %c0_11 = arith.constant 0 : index
    %14 = vector.load %arg5[%c0_10, %c0_11] : memref<1x128xf32, #tpu.memory_space<vmem>>, vector<1x128xf32>
    %cst_12 = arith.constant dense<0.000000e+00> : vector<8x128xf32>
    %15 = tpu.matmul %12, %13, %cst_12 {dimension_numbers = #tpu.dot_dimension_numbers<[1], [0], [0], [1], [0, 0, 1, 1], [], []>} : vector<8x128xf32>, vector<128x128xf32>, vector<8x128xf32> -> vector<8x128xf32>
    %16 = vector.broadcast %14 : vector<1x128xf32> to vector<8x128xf32>
    %17 = arith.addf %15, %16 : vector<8x128xf32>
    %cst_13 = arith.constant 5.000000e-01 : f32
    %18 = vector.broadcast %cst_13 : f32 to vector<8x128xf32>
    %19 = arith.mulf %18, %17 : vector<8x128xf32>
    %20 = math.tanh %19 : vector<8x128xf32>
    %cst_14 = arith.constant 5.000000e-01 : f32
    %21 = vector.broadcast %cst_14 : f32 to vector<8x128xf32>
    %22 = arith.mulf %21, %20 : vector<8x128xf32>
    %cst_15 = arith.constant 5.000000e-01 : f32
    %23 = vector.broadcast %cst_15 : f32 to vector<8x128xf32>
    %24 = arith.addf %23, %22 : vector<8x128xf32>
    %c0_16 = arith.constant 0 : index
    %c0_17 = arith.constant 0 : index
    %25 = vector.load %arg6[%c0_16, %c0_17] : memref<128x128xf32, #tpu.memory_space<vmem>>, vector<128x128xf32>
    %c0_18 = arith.constant 0 : index
    %c0_19 = arith.constant 0 : index
    %26 = vector.load %arg7[%c0_18, %c0_19] : memref<1x128xf32, #tpu.memory_space<vmem>>, vector<1x128xf32>
    %cst_20 = arith.constant dense<0.000000e+00> : vector<8x128xf32>
    %27 = tpu.matmul %24, %25, %cst_20 {dimension_numbers = #tpu.dot_dimension_numbers<[1], [0], [0], [1], [0, 0, 1, 1], [], []>} : vector<8x128xf32>, vector<128x128xf32>, vector<8x128xf32> -> vector<8x128xf32>
    %28 = vector.broadcast %26 : vector<1x128xf32> to vector<8x128xf32>
    %29 = arith.addf %27, %28 : vector<8x128xf32>
    %cst_21 = arith.constant 5.000000e-01 : f32
    %30 = vector.broadcast %cst_21 : f32 to vector<8x128xf32>
    %31 = arith.mulf %30, %29 : vector<8x128xf32>
    %32 = math.tanh %31 : vector<8x128xf32>
    %cst_22 = arith.constant 5.000000e-01 : f32
    %33 = vector.broadcast %cst_22 : f32 to vector<8x128xf32>
    %34 = arith.mulf %33, %32 : vector<8x128xf32>
    %cst_23 = arith.constant 5.000000e-01 : f32
    %35 = vector.broadcast %cst_23 : f32 to vector<8x128xf32>
    %36 = arith.addf %35, %34 : vector<8x128xf32>
    %c0_24 = arith.constant 0 : index
    %c0_25 = arith.constant 0 : index
    %37 = vector.load %arg8[%c0_24, %c0_25] : memref<8x128xf32, #tpu.memory_space<vmem>>, vector<8x128xf32>
    tpu.vector_store %arg8[%c0_24, %c0_25], %36 {strides = array<i32>} : memref<8x128xf32, #tpu.memory_space<vmem>>, vector<8x128xf32>,
    return
  }
  func.func @transform_0(%arg0: i32) -> (i32, i32) {
    %c0_i32 = arith.constant 0 : i32
    %c0_i32_0 = arith.constant 0 : i32
    return %arg0, %c0_i32 : i32, i32
  }
  func.func @transform_1(%arg0: i32) -> (i32, i32) {
    %c0_i32 = arith.constant 0 : i32
    %c0_i32_0 = arith.constant 0 : i32
    %c0_i32_1 = arith.constant 0 : i32
    return %c0_i32, %c0_i32_0 : i32, i32
  }
  func.func @transform_2(%arg0: i32) -> (i32, i32) {
    %c0_i32 = arith.constant 0 : i32
    %c0_i32_0 = arith.constant 0 : i32
    %c0_i32_1 = arith.constant 0 : i32
    return %c0_i32, %c0_i32_0 : i32, i32
  }
  func.func @transform_3(%arg0: i32) -> (i32, i32) {
    %c0_i32 = arith.constant 0 : i32
    %c0_i32_0 = arith.constant 0 : i32
    %c0_i32_1 = arith.constant 0 : i32
    return %c0_i32, %c0_i32_0 : i32, i32
  }
  func.func @transform_4(%arg0: i32) -> (i32, i32) {
    %c0_i32 = arith.constant 0 : i32
    %c0_i32_0 = arith.constant 0 : i32
    %c0_i32_1 = arith.constant 0 : i32
    return %c0_i32, %c0_i32_0 : i32, i32
  }
  func.func @transform_5(%arg0: i32) -> (i32, i32) {
    %c0_i32 = arith.constant 0 : i32
    %c0_i32_0 = arith.constant 0 : i32
    %c0_i32_1 = arith.constant 0 : i32
    return %c0_i32, %c0_i32_0 : i32, i32
  }
  func.func @transform_6(%arg0: i32) -> (i32, i32) {
    %c0_i32 = arith.constant 0 : i32
    %c0_i32_0 = arith.constant 0 : i32
    %c0_i32_1 = arith.constant 0 : i32
    return %c0_i32, %c0_i32_0 : i32, i32
  }
  func.func @transform_7(%arg0: i32) -> (i32, i32) {
    %c0_i32 = arith.constant 0 : i32
    %c0_i32_0 = arith.constant 0 : i32
    return %arg0, %c0_i32 : i32, i32
  }
}

module attributes {stable_mosaic.version = 11 : i64} {
  func.func @kernel(%arg0: i32, %arg1: memref<8x128xf32, #tpu.memory_space<vmem>>, %arg2: memref<128x128xf32, #tpu.memory_space<vmem>>, %arg3: memref<1x128xf32, #tpu.memory_space<vmem>>, %arg4: memref<128x128xf32, #tpu.memory_space<vmem>>, %arg5: memref<1x128xf32, #tpu.memory_space<vmem>>, %arg6: memref<128x128xf32, #tpu.memory_space<vmem>>, %arg7: memref<1x128xf32, #tpu.memory_space<vmem>>, %arg8: memref<8x128xf32, #tpu.memory_space<vmem>>) attributes {dimension_semantics = [#tpu.dimension_semantics<parallel>], iteration_bounds = array<i64: 1>, scalar_prefetch = 0 : i64, scratch_operands = 0 : i64, tpu.core_type = #tpu.core_type<tc>, window_params = [{transform_indices = @transform_0, window_bounds = array<i64: 8, 128>}, {pipeline_mode = #tpu.pipeline_mode<synchronous>, transform_indices = @transform_1, window_bounds = array<i64: 128, 128>}, {pipeline_mode = #tpu.pipeline_mode<synchronous>, transform_indices = @transform_2, window_bounds = array<i64: 1, 128>}, {pipeline_mode = #tpu.pipeline_mode<synchronous>, transform_indices = @transform_3, window_bounds = array<i64: 128, 128>}, {pipeline_mode = #tpu.pipeline_mode<synchronous>, transform_indices = @transform_4, window_bounds = array<i64: 1, 128>}, {pipeline_mode = #tpu.pipeline_mode<synchronous>, transform_indices = @transform_5, window_bounds = array<i64: 128, 128>}, {pipeline_mode = #tpu.pipeline_mode<synchronous>, transform_indices = @transform_6, window_bounds = array<i64: 1, 128>}, {transform_indices = @transform_7, window_bounds = array<i64: 8, 128>}]} {
    %c0 = arith.constant 0 : index
    %c0_0 = arith.constant 0 : index
    %0 = vector.load %arg1[%c0, %c0_0] : memref<8x128xf32, #tpu.memory_space<vmem>>, vector<8x128xf32>
    %c0_1 = arith.constant 0 : index
    %c0_2 = arith.constant 0 : index
    %1 = vector.load %arg2[%c0_1, %c0_2] : memref<128x128xf32, #tpu.memory_space<vmem>>, vector<128x128xf32>
    %c0_3 = arith.constant 0 : index
    %c0_4 = arith.constant 0 : index
    %2 = vector.load %arg3[%c0_3, %c0_4] : memref<1x128xf32, #tpu.memory_space<vmem>>, vector<1x128xf32>
    %cst = arith.constant dense<0.000000e+00> : vector<8x128xf32>
    %3 = tpu.matmul %0, %1, %cst {dimension_numbers = #tpu.dot_dimension_numbers<[1], [0], [0], [1], [0, 0, 1, 1], [], []>} : vector<8x128xf32>, vector<128x128xf32>, vector<8x128xf32> -> vector<8x128xf32>
    %4 = vector.broadcast %2 : vector<1x128xf32> to vector<8x128xf32>
    %5 = arith.addf %3, %4 : vector<8x128xf32>
    %cst_5 = arith.constant 5.000000e-01 : f32
    %6 = vector.broadcast %cst_5 : f32 to vector<8x128xf32>
    %7 = arith.mulf %6, %5 : vector<8x128xf32>
    %8 = math.tanh %7 : vector<8x128xf32>
    %cst_6 = arith.constant 5.000000e-01 : f32
    %9 = vector.broadcast %cst_6 : f32 to vector<8x128xf32>
    %10 = arith.mulf %9, %8 : vector<8x128xf32>
    %cst_7 = arith.constant 5.000000e-01 : f32
    %11 = vector.broadcast %cst_7 : f32 to vector<8x128xf32>
    %12 = arith.addf %11, %10 : vector<8x128xf32>
    %c0_8 = arith.constant 0 : index
    %c0_9 = arith.constant 0 : index
    %13 = vector.load %arg4[%c0_8, %c0_9] : memref<128x128xf32, #tpu.memory_space<vmem>>, vector<128x128xf32>
    %c0_10 = arith.constant 0 : index
    %c0_11 = arith.constant 0 : index
    %14 = vector.load %arg5[%c0_10, %c0_11] : memref<1x128xf32, #tpu.memory_space<vmem>>, vector<1x128xf32>
    %cst_12 = arith.constant dense<0.000000e+00> : vector<8x128xf32>
    %15 = tpu.matmul %12, %13, %cst_12 {dimension_numbers = #tpu.dot_dimension_numbers<[1], [0], [0], [1], [0, 0, 1, 1], [], []>} : vector<8x128xf32>, vector<128x128xf32>, vector<8x128xf32> -> vector<8x128xf32>
    %16 = vector.broadcast %14 : vector<1x128xf32> to vector<8x128xf32>
    %17 = arith.addf %15, %16 : vector<8x128xf32>
    %cst_13 = arith.constant 5.000000e-01 : f32
    %18 = vector.broadcast %cst_13 : f32 to vector<8x128xf32>
    %19 = arith.mulf %18, %17 : vector<8x128xf32>
    %20 = math.tanh %19 : vector<8x128xf32>
    %cst_14 = arith.constant 5.000000e-01 : f32
    %21 = vector.broadcast %cst_14 : f32 to vector<8x128xf32>
    %22 = arith.mulf %21, %20 : vector<8x128xf32>
    %cst_15 = arith.constant 5.000000e-01 : f32
    %23 = vector.broadcast %cst_15 : f32 to vector<8x128xf32>
    %24 = arith.addf %23, %22 : vector<8x128xf32>
    %c0_16 = arith.constant 0 : index
    %c0_17 = arith.constant 0 : index
    %25 = vector.load %arg6[%c0_16, %c0_17] : memref<128x128xf32, #tpu.memory_space<vmem>>, vector<128x128xf32>
    %c0_18 = arith.constant 0 : index
    %c0_19 = arith.constant 0 : index
    %26 = vector.load %arg7[%c0_18, %c0_19] : memref<1x128xf32, #tpu.memory_space<vmem>>, vector<1x128xf32>
    %cst_20 = arith.constant dense<0.000000e+00> : vector<8x128xf32>
    %27 = tpu.matmul %24, %25, %cst_20 {dimension_numbers = #tpu.dot_dimension_numbers<[1], [0], [0], [1], [0, 0, 1, 1], [], []>} : vector<8x128xf32>, vector<128x128xf32>, vector<8x128xf32> -> vector<8x128xf32>
    %28 = vector.broadcast %26 : vector<1x128xf32> to vector<8x128xf32>
    %29 = arith.addf %27, %28 : vector<8x128xf32>
    %cst_21 = arith.constant 5.000000e-01 : f32
    %30 = vector.broadcast %cst_21 : f32 to vector<8x128xf32>
    %31 = arith.mulf %30, %29 : vector<8x128xf32>
    %32 = math.tanh %31 : vector<8x128xf32>
    %cst_22 = arith.constant 5.000000e-01 : f32
    %33 = vector.broadcast %cst_22 : f32 to vector<8x128xf32>
    %34 = arith.mulf %33, %32 : vector<8x128xf32>
    %cst_23 = arith.constant 5.000000e-01 : f32
    %35 = vector.broadcast %cst_23 : f32 to vector<8x128xf32>
    %36 = arith.addf %35, %34 : vector<8x128xf32>
    %c0_24 = arith.constant 0 : index
    %c0_25 = arith.constant 0 : index
    %37 = vector.load %arg8[%c0_24, %c0_25] : memref<8x128xf32, #tpu.memory_space<vmem>>, vector<8x128xf32>
    tpu.vector_store %arg8[%c0_24, %c0_25], %36 {strides = array<i32>} : memref<8x128xf32, #tpu.memory_space<vmem>>, vector<8x128xf32>,
    return
  }
  func.func @transform_0(%arg0: i32) -> (i32, i32) {
    %c0_i32 = arith.constant 0 : i32
    %c0_i32_0 = arith.constant 0 : i32
    return %arg0, %c0_i32 : i32, i32
  }
  func.func @transform_1(%arg0: i32) -> (i32, i32) {
    %c0_i32 = arith.constant 0 : i32
    %c0_i32_0 = arith.constant 0 : i32
    %c0_i32_1 = arith.constant 0 : i32
    return %c0_i32, %c0_i32_0 : i32, i32
  }
  func.func @transform_2(%arg0: i32) -> (i32, i32) {
    %c0_i32 = arith.constant 0 : i32
    %c0_i32_0 = arith.constant 0 : i32
    %c0_i32_1 = arith.constant 0 : i32
    return %c0_i32, %c0_i32_0 : i32, i32
  }
  func.func @transform_3(%arg0: i32) -> (i32, i32) {
    %c0_i32 = arith.constant 0 : i32
    %c0_i32_0 = arith.constant 0 : i32
    %c0_i32_1 = arith.constant 0 : i32
    return %c0_i32, %c0_i32_0 : i32, i32
  }
  func.func @transform_4(%arg0: i32) -> (i32, i32) {
    %c0_i32 = arith.constant 0 : i32
    %c0_i32_0 = arith.constant 0 : i32
    %c0_i32_1 = arith.constant 0 : i32
    return %c0_i32, %c0_i32_0 : i32, i32
  }
  func.func @transform_5(%arg0: i32) -> (i32, i32) {
    %c0_i32 = arith.constant 0 : i32
    %c0_i32_0 = arith.constant 0 : i32
    %c0_i32_1 = arith.constant 0 : i32
    return %c0_i32, %c0_i32_0 : i32, i32
  }
  func.func @transform_6(%arg0: i32) -> (i32, i32) {
    %c0_i32 = arith.constant 0 : i32
    %c0_i32_0 = arith.constant 0 : i32
    %c0_i32_1 = arith.constant 0 : i32
    return %c0_i32, %c0_i32_0 : i32, i32
  }
  func.func @transform_7(%arg0: i32) -> (i32, i32) {
    %c0_i32 = arith.constant 0 : i32
    %c0_i32_0 = arith.constant 0 : i32
    return %arg0, %c0_i32 : i32, i32
  }
}

</mosaic_0001>

<llo_original>
// kernel: tpu_custom_call.1
$region0: #{tpu_custom_call.1}
  #allocation0 [shape = 'u32[]', space=smem, size = 0x4, offset = 0x4, fixed_abs, tag = 'smem constant byte address 0x4 - core index']
  #allocation1 [shape = 'u32[72,128]{1,0:T(1,128)}', space=vmem, size = 0x9000, scoped, tag = 'internal scratch']
  %s0 = inlined_call_operand.hbm [shape: f32[8,128], index: 0, kind: input, shape index: {}]
  %s1 = inlined_call_operand.hbm [shape: f32[128,128], index: 1, kind: input, shape index: {}]
  %s2 = inlined_call_operand.vmem [shape: f32[1,128], index: 2, kind: input, shape index: {}]
  %s3 = inlined_call_operand.hbm [shape: f32[128,128], index: 3, kind: input, shape index: {}]
  %s4 = inlined_call_operand.vmem [shape: f32[1,128], index: 4, kind: input, shape index: {}]
  %s5 = inlined_call_operand.hbm [shape: f32[128,128], index: 5, kind: input, shape index: {}]
  %s6 = inlined_call_operand.vmem [shape: f32[1,128], index: 6, kind: input, shape index: {}]
  %s7 = inlined_call_operand.hbm [shape: f32[8,128], index: 7, kind: output, shape index: {}]
  %s8 = sld [smem:[#allocation0]]
  $region54: #{tpu_custom_call.1} parent=0
    _
  %s10 = ssub.s32 1, %s8
  %s11 = scalar_select 0, %s10, %s8
  $region1: #{tpu_custom_call.1} parent=0
    #allocation2 [shape = 'u8[4096]{0}', space=vmem, size = 0x1000, scoped, tag = 'input window, operand 0, single buffered']
    #allocation3 [shape = 's32[1]{0}', space=sflag, size = 0x4, scoped, tag = 'scoped memory for tpu_custom_call.1']
    #allocation4 [shape = 's32[1]{0}', space=sflag, size = 0x4, scoped, tag = 'scoped memory for tpu_custom_call.1']
    #allocation5 [shape = 'u8[65536]{0}', space=vmem, size = 0x10000, scoped, tag = 'input window, operand 1, single buffered']
    #allocation6 [shape = 's32[1]{0}', space=sflag, size = 0x4, scoped, tag = 'scoped memory for tpu_custom_call.1']
    #allocation7 [shape = 'u8[65536]{0}', space=vmem, size = 0x10000, scoped, tag = 'input window, operand 3, single buffered']
    #allocation8 [shape = 'u8[65536]{0}', space=vmem, size = 0x10000, scoped, tag = 'input window, operand 5, single buffered']
    #allocation9 [shape = 's32[1]{0}', space=sflag, size = 0x4, scoped, tag = 'scoped memory for tpu_custom_call.1']
    #allocation10 [shape = 'u8[4096]{0}', space=vmem, size = 0x1000, scoped, tag = 'output window, operand 0, single buffered']
    %12 = vsyncpa [#allocation3], 0
    %13 = vsyncpa [#allocation6], 0
    %14 = vsyncpa [#allocation9], 0
    %15 = vsyncpa [#allocation4], 0
    // Predicated region
    $region2: #{tpu_custom_call.1} parent=1 // pred_check
      _
    $region3: #{tpu_custom_call.1} parent=1 // pred_check_branch
      %17 = sbr.rel (0) target = $region5
    $region4: #{tpu_custom_call.1} parent=1 // pred_region
      %19 = vsyncadd [#allocation3], 0
      %s21 = sshll.u32 %s0, 4
      %s22 = int_to_ptr.hbm [resolvable:$true] %s21
      %s23 = sshll.u32 [#allocation2], 4
      %s24 = int_to_ptr.vmem [resolvable:$true] %s23
      %26 = dma.hbm_to_vmem [thread:$0]  %s22, 128, %s24, [#allocation3]
    $region5: #{tpu_custom_call.1} parent=1 // pred_fallthru
      _
    // Predicated region
    $region6: #{tpu_custom_call.1} parent=1 // pred_check
      _
    $region7: #{tpu_custom_call.1} parent=1 // pred_check_branch
      %28 = sbr.rel (0) target = $region9
    $region8: #{tpu_custom_call.1} parent=1 // pred_region
      %30 = vsyncadd [#allocation6], 0
      %s31 = sshll.u32 %s1, 4
      %s32 = int_to_ptr.hbm [resolvable:$true] %s31
      %s33 = sshll.u32 [#allocation5], 4
      %s34 = int_to_ptr.vmem [resolvable:$true] %s33
      %39 = dma.hbm_to_vmem [thread:$0]  %s32, 2048, %s34, [#allocation6], 128, 128, 8
    $region9: #{tpu_custom_call.1} parent=1 // pred_fallthru
      _
    // Predicated region
    $region10: #{tpu_custom_call.1} parent=1 // pred_check
      _
    $region11: #{tpu_custom_call.1} parent=1 // pred_check_branch
      %41 = sbr.rel (0) target = $region13
    $region12: #{tpu_custom_call.1} parent=1 // pred_region
      _
    $region13: #{tpu_custom_call.1} parent=1 // pred_fallthru
      _
    // Predicated region
    $region14: #{tpu_custom_call.1} parent=1 // pred_check
      _
    $region15: #{tpu_custom_call.1} parent=1 // pred_check_branch
      %43 = sbr.rel (0) target = $region17
    $region16: #{tpu_custom_call.1} parent=1 // pred_region
      %45 = vsyncadd [#allocation6], 0
      %s46 = sshll.u32 %s3, 4
      %s47 = int_to_ptr.hbm [resolvable:$true] %s46
      %s48 = sshll.u32 [#allocation7], 4
      %s49 = int_to_ptr.vmem [resolvable:$true] %s48
      %54 = dma.hbm_to_vmem [thread:$0]  %s47, 2048, %s49, [#allocation6], 128, 128, 8
    $region17: #{tpu_custom_call.1} parent=1 // pred_fallthru
      _
    // Predicated region
    $region18: #{tpu_custom_call.1} parent=1 // pred_check
      _
    $region19: #{tpu_custom_call.1} parent=1 // pred_check_branch
      %56 = sbr.rel (0) target = $region21
    $region20: #{tpu_custom_call.1} parent=1 // pred_region
      _
    $region21: #{tpu_custom_call.1} parent=1 // pred_fallthru
      _
    // Predicated region
    $region22: #{tpu_custom_call.1} parent=1 // pred_check
      _
    $region23: #{tpu_custom_call.1} parent=1 // pred_check_branch
      %58 = sbr.rel (0) target = $region25
    $region24: #{tpu_custom_call.1} parent=1 // pred_region
      %60 = vsyncadd [#allocation9], 0
      %s61 = sshll.u32 %s5, 4
      %s62 = int_to_ptr.hbm [resolvable:$true] %s61
      %s63 = sshll.u32 [#allocation8], 4
      %s64 = int_to_ptr.vmem [resolvable:$true] %s63
      %69 = dma.hbm_to_vmem [thread:$0]  %s62, 2048, %s64, [#allocation9], 128, 128, 8
    $region25: #{tpu_custom_call.1} parent=1 // pred_fallthru
      _
    // Predicated region
    $region26: #{tpu_custom_call.1} parent=1 // pred_check
      _
    $region27: #{tpu_custom_call.1} parent=1 // pred_check_branch
      %71 = sbr.rel (0) target = $region29
    $region28: #{tpu_custom_call.1} parent=1 // pred_region
      _
    $region29: #{tpu_custom_call.1} parent=1 // pred_fallthru
      _
    // Predicated region
    $region30: #{tpu_custom_call.1} parent=1 // pred_check
      _
    $region31: #{tpu_custom_call.1} parent=1 // pred_check_branch
      %73 = sbr.rel (0) target = $region33
    $region32: #{tpu_custom_call.1} parent=1 // pred_region
      %75 = dma.done [#allocation3], 128
    $region33: #{tpu_custom_call.1} parent=1 // pred_fallthru
      _
    // Predicated region
    $region34: #{tpu_custom_call.1} parent=1 // pred_check
      _
    $region35: #{tpu_custom_call.1} parent=1 // pred_check_branch
      %77 = sbr.rel (0) target = $region37
    $region36: #{tpu_custom_call.1} parent=1 // pred_region
      %79 = dma.done [#allocation6], 2048
    $region37: #{tpu_custom_call.1} parent=1 // pred_fallthru
      _
    // Predicated region
    $region38: #{tpu_custom_call.1} parent=1 // pred_check
      _
    $region39: #{tpu_custom_call.1} parent=1 // pred_check_branch
      %81 = sbr.rel (0) target = $region41
    $region40: #{tpu_custom_call.1} parent=1 // pred_region
      %83 = dma.done [#allocation6], 2048
    $region41: #{tpu_custom_call.1} parent=1 // pred_fallthru
      _
    // Predicated region
    $region42: #{tpu_custom_call.1} parent=1 // pred_check
      _
    $region43: #{tpu_custom_call.1} parent=1 // pred_check_branch
      %85 = sbr.rel (0) target = $region45
    $region44: #{tpu_custom_call.1} parent=1 // pred_region
      %87 = dma.done [#allocation9], 2048
    $region45: #{tpu_custom_call.1} parent=1 // pred_fallthru
      _
    %v88 = vld [vmem:[#allocation2] sm:$0xff]
    %v89 = vld [vmem:[#allocation5] sm:$0xff]
    %v90 = vld [vmem:[#allocation5 + $0x8] sm:$0xff]
    %v91 = vld [vmem:[#allocation5 + $0x10] sm:$0xff]
    %v92 = vld [vmem:[#allocation5 + $0x18] sm:$0xff]
    %v93 = vld [vmem:[#allocation5 + $0x20] sm:$0xff]
    %v94 = vld [vmem:[#allocation5 + $0x28] sm:$0xff]
    %v95 = vld [vmem:[#allocation5 + $0x30] sm:$0xff]
    %v96 = vld [vmem:[#allocation5 + $0x38] sm:$0xff]
    %v97 = vld [vmem:[#allocation5 + $0x40] sm:$0xff]
    %v98 = vld [vmem:[#allocation5 + $0x48] sm:$0xff]
    %v99 = vld [vmem:[#allocation5 + $0x50] sm:$0xff]
    %v100 = vld [vmem:[#allocation5 + $0x58] sm:$0xff]
    %v101 = vld [vmem:[#allocation5 + $0x60] sm:$0xff]
    %v102 = vld [vmem:[#allocation5 + $0x68] sm:$0xff]
    %v103 = vld [vmem:[#allocation5 + $0x70] sm:$0xff]
    %v104 = vld [vmem:[#allocation5 + $0x78] sm:$0xff]
    %v105 = vld [vmem:[%s2] sm:$0x1]
    %v107 = vperm.slane %v105, 0
    %109 = vmatpush.msra.mxu0 %v104
    %110 = vmatpush.msra.mxu0 %v103
    %111 = vmatpush.msra.mxu0 %v102
    %112 = vmatpush.msra.mxu0 %v101
    %113 = vmatpush.msra.mxu0 %v100
    %114 = vmatpush.msra.mxu0 %v99
    %115 = vmatpush.msra.mxu0 %v98
    %116 = vmatpush.msra.mxu0 %v97
    %117 = vmatpush.msra.mxu0 %v96
    %118 = vmatpush.msra.mxu0 %v95
    %119 = vmatpush.msra.mxu0 %v94
    %120 = vmatpush.msra.mxu0 %v93
    %121 = vmatpush.msra.mxu0 %v92
    %122 = vmatpush.msra.mxu0 %v91
    %123 = vmatpush.msra.mxu0 %v90
    %124 = vmatpush.msra.mxu0 %v89
    %125 = vmatmul.f32.gmra.mxu0 %v88
    %v126 = vpop.f32.mrf.mxu0
    %v127 = vadd.f32 %v107, %v126
    %128 = vdwg.mxu0
    %v129 = vmul.f32 %v127, 0.5
    %v130 = vtanh.pop %v129
    %v131 = vmul.f32 %v130, 0.5
    %v132 = vadd.f32 %v131, 0.5
    %v133 = vld [vmem:[#allocation7] sm:$0xff]
    %v134 = vld [vmem:[#allocation7 + $0x8] sm:$0xff]
    %v135 = vld [vmem:[#allocation7 + $0x10] sm:$0xff]
    %v136 = vld [vmem:[#allocation7 + $0x18] sm:$0xff]
    %v137 = vld [vmem:[#allocation7 + $0x20] sm:$0xff]
    %v138 = vld [vmem:[#allocation7 + $0x28] sm:$0xff]
    %v139 = vld [vmem:[#allocation7 + $0x30] sm:$0xff]
    %v140 = vld [vmem:[#allocation7 + $0x38] sm:$0xff]
    %v141 = vld [vmem:[#allocation7 + $0x40] sm:$0xff]
    %v142 = vld [vmem:[#allocation7 + $0x48] sm:$0xff]
    %v143 = vld [vmem:[#allocation7 + $0x50] sm:$0xff]
    %v144 = vld [vmem:[#allocation7 + $0x58] sm:$0xff]
    %v145 = vld [vmem:[#allocation7 + $0x60] sm:$0xff]
    %v146 = vld [vmem:[#allocation7 + $0x68] sm:$0xff]
    %v147 = vld [vmem:[#allocation7 + $0x70] sm:$0xff]
    %v148 = vld [vmem:[#allocation7 + $0x78] sm:$0xff]
    %v149 = vld [vmem:[%s4] sm:$0x1]
    %v151 = vperm.slane %v149, 0
    %153 = vmatpush.msra.mxu0 %v148
    %154 = vmatpush.msra.mxu0 %v147
    %155 = vmatpush.msra.mxu0 %v146
    %156 = vmatpush.msra.mxu0 %v145
    %157 = vmatpush.msra.mxu0 %v144
    %158 = vmatpush.msra.mxu0 %v143
    %159 = vmatpush.msra.mxu0 %v142
    %160 = vmatpush.msra.mxu0 %v141
    %161 = vmatpush.msra.mxu0 %v140
    %162 = vmatpush.msra.mxu0 %v139
    %163 = vmatpush.msra.mxu0 %v138
    %164 = vmatpush.msra.mxu0 %v137
    %165 = vmatpush.msra.mxu0 %v136
    %166 = vmatpush.msra.mxu0 %v135
    %167 = vmatpush.msra.mxu0 %v134
    %168 = vmatpush.msra.mxu0 %v133
    %169 = vmatmul.f32.gmra.mxu0 %v132
    %v170 = vpop.f32.mrf.mxu0
    %v171 = vadd.f32 %v151, %v170
    %172 = vdwg.mxu0
    %v173 = vmul.f32 %v171, 0.5
    %v174 = vtanh.pop %v173
    %v175 = vmul.f32 %v174, 0.5
    %v176 = vadd.f32 %v175, 0.5
    %v177 = vld [vmem:[#allocation8] sm:$0xff]
    %v178 = vld [vmem:[#allocation8 + $0x8] sm:$0xff]
    %v179 = vld [vmem:[#allocation8 + $0x10] sm:$0xff]
    %v180 = vld [vmem:[#allocation8 + $0x18] sm:$0xff]
    %v181 = vld [vmem:[#allocation8 + $0x20] sm:$0xff]
    %v182 = vld [vmem:[#allocation8 + $0x28] sm:$0xff]
    %v183 = vld [vmem:[#allocation8 + $0x30] sm:$0xff]
    %v184 = vld [vmem:[#allocation8 + $0x38] sm:$0xff]
    %v185 = vld [vmem:[#allocation8 + $0x40] sm:$0xff]
    %v186 = vld [vmem:[#allocation8 + $0x48] sm:$0xff]
    %v187 = vld [vmem:[#allocation8 + $0x50] sm:$0xff]
    %v188 = vld [vmem:[#allocation8 + $0x58] sm:$0xff]
    %v189 = vld [vmem:[#allocation8 + $0x60] sm:$0xff]
    %v190 = vld [vmem:[#allocation8 + $0x68] sm:$0xff]
    %v191 = vld [vmem:[#allocation8 + $0x70] sm:$0xff]
    %v192 = vld [vmem:[#allocation8 + $0x78] sm:$0xff]
    %v193 = vld [vmem:[%s6] sm:$0x1]
    %v195 = vperm.slane %v193, 0
    %197 = vmatpush.msra.mxu0 %v192
    %198 = vmatpush.msra.mxu0 %v191
    %199 = vmatpush.msra.mxu0 %v190
    %200 = vmatpush.msra.mxu0 %v189
    %201 = vmatpush.msra.mxu0 %v188
    %202 = vmatpush.msra.mxu0 %v187
    %203 = vmatpush.msra.mxu0 %v186
    %204 = vmatpush.msra.mxu0 %v185
    %205 = vmatpush.msra.mxu0 %v184
    %206 = vmatpush.msra.mxu0 %v183
    %207 = vmatpush.msra.mxu0 %v182
    %208 = vmatpush.msra.mxu0 %v181
    %209 = vmatpush.msra.mxu0 %v180
    %210 = vmatpush.msra.mxu0 %v179
    %211 = vmatpush.msra.mxu0 %v178
    %212 = vmatpush.msra.mxu0 %v177
    %213 = vmatmul.f32.gmra.mxu0 %v176
    %v214 = vpop.f32.mrf.mxu0
    %v215 = vadd.f32 %v195, %v214
    %216 = vdwg.mxu0
    %v217 = vmul.f32 %v215, 0.5
    %v218 = vtanh.pop %v217
    %v219 = vmul.f32 %v218, 0.5
    %v220 = vadd.f32 %v219, 0.5
    %221 = vst [vmem:[#allocation10] sm:$0xff] %v220
    // Predicated region
    $region46: #{tpu_custom_call.1} parent=1 // pred_check
      _
    $region47: #{tpu_custom_call.1} parent=1 // pred_check_branch
      %223 = sbr.rel (0) target = $region49
    $region48: #{tpu_custom_call.1} parent=1 // pred_region
      %225 = vsyncadd [#allocation4], 0
      %s227 = sshll.u32 [#allocation10], 4
      %s228 = int_to_ptr.vmem [resolvable:$true] %s227
      %s229 = sshll.u32 %s7, 4
      %s230 = int_to_ptr.hbm [resolvable:$true] %s229
      %232 = dma.vmem_to_hbm [thread:$0]  %s228, 128, %s230, [#allocation4]
    $region49: #{tpu_custom_call.1} parent=1 // pred_fallthru
      _
    // Predicated region
    $region50: #{tpu_custom_call.1} parent=1 // pred_check
      _
    $region51: #{tpu_custom_call.1} parent=1 // pred_check_branch
      %234 = sbr.rel (0) target = $region53
    $region52: #{tpu_custom_call.1} parent=1 // pred_region
      %236 = dma.done [#allocation4], 128
    $region53: #{tpu_custom_call.1} parent=1 // pred_fallthru
      _
    %237 = vsyncpa [#allocation3], 1
    %238 = vsyncpa [#allocation6], 1
    %239 = vsyncpa [#allocation9], 1
    %240 = vsyncpa [#allocation4], 1

// kernel: tpu_custom_call.1
$region0: #{tpu_custom_call.1}
  #allocation0 [shape = 'u32[]', space=smem, size = 0x4, offset = 0x4, fixed_abs, tag = 'smem constant byte address 0x4 - core index']
  #allocation1 [shape = 'u32[72,128]{1,0:T(1,128)}', space=vmem, size = 0x9000, scoped, tag = 'internal scratch']
  %s0 = inlined_call_operand.hbm [shape: f32[8,128], index: 0, kind: input, shape index: {}]
  %s1 = inlined_call_operand.hbm [shape: f32[128,128], index: 1, kind: input, shape index: {}]
  %s2 = inlined_call_operand.vmem [shape: f32[1,128], index: 2, kind: input, shape index: {}]
  %s3 = inlined_call_operand.hbm [shape: f32[128,128], index: 3, kind: input, shape index: {}]
  %s4 = inlined_call_operand.vmem [shape: f32[1,128], index: 4, kind: input, shape index: {}]
  %s5 = inlined_call_operand.hbm [shape: f32[128,128], index: 5, kind: input, shape index: {}]
  %s6 = inlined_call_operand.vmem [shape: f32[1,128], index: 6, kind: input, shape index: {}]
  %s7 = inlined_call_operand.hbm [shape: f32[8,128], index: 7, kind: output, shape index: {}]
  %s8 = sld [smem:[#allocation0]]
  $region54: #{tpu_custom_call.1} parent=0
    _
  %s10 = ssub.s32 1, %s8
  %s11 = scalar_select 0, %s10, %s8
  $region1: #{tpu_custom_call.1} parent=0
    #allocation2 [shape = 'u8[4096]{0}', space=vmem, size = 0x1000, scoped, tag = 'input window, operand 0, single buffered']
    #allocation3 [shape = 's32[1]{0}', space=sflag, size = 0x4, scoped, tag = 'scoped memory for tpu_custom_call.1']
    #allocation4 [shape = 's32[1]{0}', space=sflag, size = 0x4, scoped, tag = 'scoped memory for tpu_custom_call.1']
    #allocation5 [shape = 'u8[65536]{0}', space=vmem, size = 0x10000, scoped, tag = 'input window, operand 1, single buffered']
    #allocation6 [shape = 's32[1]{0}', space=sflag, size = 0x4, scoped, tag = 'scoped memory for tpu_custom_call.1']
    #allocation7 [shape = 'u8[65536]{0}', space=vmem, size = 0x10000, scoped, tag = 'input window, operand 3, single buffered']
    #allocation8 [shape = 'u8[65536]{0}', space=vmem, size = 0x10000, scoped, tag = 'input window, operand 5, single buffered']
    #allocation9 [shape = 's32[1]{0}', space=sflag, size = 0x4, scoped, tag = 'scoped memory for tpu_custom_call.1']
    #allocation10 [shape = 'u8[4096]{0}', space=vmem, size = 0x1000, scoped, tag = 'output window, operand 0, single buffered']
    %12 = vsyncpa [#allocation3], 0
    %13 = vsyncpa [#allocation6], 0
    %14 = vsyncpa [#allocation9], 0
    %15 = vsyncpa [#allocation4], 0
    // Predicated region
    $region2: #{tpu_custom_call.1} parent=1 // pred_check
      _
    $region3: #{tpu_custom_call.1} parent=1 // pred_check_branch
      %17 = sbr.rel (0) target = $region5
    $region4: #{tpu_custom_call.1} parent=1 // pred_region
      %19 = vsyncadd [#allocation3], 0
      %s21 = sshll.u32 %s0, 4
      %s22 = int_to_ptr.hbm [resolvable:$true] %s21
      %s23 = sshll.u32 [#allocation2], 4
      %s24 = int_to_ptr.vmem [resolvable:$true] %s23
      %26 = dma.hbm_to_vmem [thread:$0]  %s22, 128, %s24, [#allocation3]
    $region5: #{tpu_custom_call.1} parent=1 // pred_fallthru
      _
    // Predicated region
    $region6: #{tpu_custom_call.1} parent=1 // pred_check
      _
    $region7: #{tpu_custom_call.1} parent=1 // pred_check_branch
      %28 = sbr.rel (0) target = $region9
    $region8: #{tpu_custom_call.1} parent=1 // pred_region
      %30 = vsyncadd [#allocation6], 0
      %s31 = sshll.u32 %s1, 4
      %s32 = int_to_ptr.hbm [resolvable:$true] %s31
      %s33 = sshll.u32 [#allocation5], 4
      %s34 = int_to_ptr.vmem [resolvable:$true] %s33
      %39 = dma.hbm_to_vmem [thread:$0]  %s32, 2048, %s34, [#allocation6], 128, 128, 8
    $region9: #{tpu_custom_call.1} parent=1 // pred_fallthru
      _
    // Predicated region
    $region10: #{tpu_custom_call.1} parent=1 // pred_check
      _
    $region11: #{tpu_custom_call.1} parent=1 // pred_check_branch
      %41 = sbr.rel (0) target = $region13
    $region12: #{tpu_custom_call.1} parent=1 // pred_region
      _
    $region13: #{tpu_custom_call.1} parent=1 // pred_fallthru
      _
    // Predicated region
    $region14: #{tpu_custom_call.1} parent=1 // pred_check
      _
    $region15: #{tpu_custom_call.1} parent=1 // pred_check_branch
      %43 = sbr.rel (0) target = $region17
    $region16: #{tpu_custom_call.1} parent=1 // pred_region
      %45 = vsyncadd [#allocation6], 0
      %s46 = sshll.u32 %s3, 4
      %s47 = int_to_ptr.hbm [resolvable:$true] %s46
      %s48 = sshll.u32 [#allocation7], 4
      %s49 = int_to_ptr.vmem [resolvable:$true] %s48
      %54 = dma.hbm_to_vmem [thread:$0]  %s47, 2048, %s49, [#allocation6], 128, 128, 8
    $region17: #{tpu_custom_call.1} parent=1 // pred_fallthru
      _
    // Predicated region
    $region18: #{tpu_custom_call.1} parent=1 // pred_check
      _
    $region19: #{tpu_custom_call.1} parent=1 // pred_check_branch
      %56 = sbr.rel (0) target = $region21
    $region20: #{tpu_custom_call.1} parent=1 // pred_region
      _
    $region21: #{tpu_custom_call.1} parent=1 // pred_fallthru
      _
    // Predicated region
    $region22: #{tpu_custom_call.1} parent=1 // pred_check
      _
    $region23: #{tpu_custom_call.1} parent=1 // pred_check_branch
      %58 = sbr.rel (0) target = $region25
    $region24: #{tpu_custom_call.1} parent=1 // pred_region
      %60 = vsyncadd [#allocation9], 0
      %s61 = sshll.u32 %s5, 4
      %s62 = int_to_ptr.hbm [resolvable:$true] %s61
      %s63 = sshll.u32 [#allocation8], 4
      %s64 = int_to_ptr.vmem [resolvable:$true] %s63
      %69 = dma.hbm_to_vmem [thread:$0]  %s62, 2048, %s64, [#allocation9], 128, 128, 8
    $region25: #{tpu_custom_call.1} parent=1 // pred_fallthru
      _
    // Predicated region
    $region26: #{tpu_custom_call.1} parent=1 // pred_check
      _
    $region27: #{tpu_custom_call.1} parent=1 // pred_check_branch
      %71 = sbr.rel (0) target = $region29
    $region28: #{tpu_custom_call.1} parent=1 // pred_region
      _
    $region29: #{tpu_custom_call.1} parent=1 // pred_fallthru
      _
    // Predicated region
    $region30: #{tpu_custom_call.1} parent=1 // pred_check
      _
    $region31: #{tpu_custom_call.1} parent=1 // pred_check_branch
      %73 = sbr.rel (0) target = $region33
    $region32: #{tpu_custom_call.1} parent=1 // pred_region
      %75 = dma.done [#allocation3], 128
    $region33: #{tpu_custom_call.1} parent=1 // pred_fallthru
      _
    // Predicated region
    $region34: #{tpu_custom_call.1} parent=1 // pred_check
      _
    $region35: #{tpu_custom_call.1} parent=1 // pred_check_branch
      %77 = sbr.rel (0) target = $region37
    $region36: #{tpu_custom_call.1} parent=1 // pred_region
      %79 = dma.done [#allocation6], 2048
    $region37: #{tpu_custom_call.1} parent=1 // pred_fallthru
      _
    // Predicated region
    $region38: #{tpu_custom_call.1} parent=1 // pred_check
      _
    $region39: #{tpu_custom_call.1} parent=1 // pred_check_branch
      %81 = sbr.rel (0) target = $region41
    $region40: #{tpu_custom_call.1} parent=1 // pred_region
      %83 = dma.done [#allocation6], 2048
    $region41: #{tpu_custom_call.1} parent=1 // pred_fallthru
      _
    // Predicated region
    $region42: #{tpu_custom_call.1} parent=1 // pred_check
      _
    $region43: #{tpu_custom_call.1} parent=1 // pred_check_branch
      %85 = sbr.rel (0) target = $region45
    $region44: #{tpu_custom_call.1} parent=1 // pred_region
      %87 = dma.done [#allocation9], 2048
    $region45: #{tpu_custom_call.1} parent=1 // pred_fallthru
      _
    %v88 = vld [vmem:[#allocation2] sm:$0xff]
    %v89 = vld [vmem:[#allocation5] sm:$0xff]
    %v90 = vld [vmem:[#allocation5 + $0x8] sm:$0xff]
    %v91 = vld [vmem:[#allocation5 + $0x10] sm:$0xff]
    %v92 = vld [vmem:[#allocation5 + $0x18] sm:$0xff]
    %v93 = vld [vmem:[#allocation5 + $0x20] sm:$0xff]
    %v94 = vld [vmem:[#allocation5 + $0x28] sm:$0xff]
    %v95 = vld [vmem:[#allocation5 + $0x30] sm:$0xff]
    %v96 = vld [vmem:[#allocation5 + $0x38] sm:$0xff]
    %v97 = vld [vmem:[#allocation5 + $0x40] sm:$0xff]
    %v98 = vld [vmem:[#allocation5 + $0x48] sm:$0xff]
    %v99 = vld [vmem:[#allocation5 + $0x50] sm:$0xff]
    %v100 = vld [vmem:[#allocation5 + $0x58] sm:$0xff]
    %v101 = vld [vmem:[#allocation5 + $0x60] sm:$0xff]
    %v102 = vld [vmem:[#allocation5 + $0x68] sm:$0xff]
    %v103 = vld [vmem:[#allocation5 + $0x70] sm:$0xff]
    %v104 = vld [vmem:[#allocation5 + $0x78] sm:$0xff]
    %v105 = vld [vmem:[%s2] sm:$0x1]
    %v107 = vperm.slane %v105, 0
    %109 = vmatpush.msra.mxu0 %v104
    %110 = vmatpush.msra.mxu0 %v103
    %111 = vmatpush.msra.mxu0 %v102
    %112 = vmatpush.msra.mxu0 %v101
    %113 = vmatpush.msra.mxu0 %v100
    %114 = vmatpush.msra.mxu0 %v99
    %115 = vmatpush.msra.mxu0 %v98
    %116 = vmatpush.msra.mxu0 %v97
    %117 = vmatpush.msra.mxu0 %v96
    %118 = vmatpush.msra.mxu0 %v95
    %119 = vmatpush.msra.mxu0 %v94
    %120 = vmatpush.msra.mxu0 %v93
    %121 = vmatpush.msra.mxu0 %v92
    %122 = vmatpush.msra.mxu0 %v91
    %123 = vmatpush.msra.mxu0 %v90
    %124 = vmatpush.msra.mxu0 %v89
    %125 = vmatmul.f32.gmra.mxu0 %v88
    %v126 = vpop.f32.mrf.mxu0
    %v127 = vadd.f32 %v107, %v126
    %128 = vdwg.mxu0
    %v129 = vmul.f32 %v127, 0.5
    %v130 = vtanh.pop %v129
    %v131 = vmul.f32 %v130, 0.5
    %v132 = vadd.f32 %v131, 0.5
    %v133 = vld [vmem:[#allocation7] sm:$0xff]
    %v134 = vld [vmem:[#allocation7 + $0x8] sm:$0xff]
    %v135 = vld [vmem:[#allocation7 + $0x10] sm:$0xff]
    %v136 = vld [vmem:[#allocation7 + $0x18] sm:$0xff]
    %v137 = vld [vmem:[#allocation7 + $0x20] sm:$0xff]
    %v138 = vld [vmem:[#allocation7 + $0x28] sm:$0xff]
    %v139 = vld [vmem:[#allocation7 + $0x30] sm:$0xff]
    %v140 = vld [vmem:[#allocation7 + $0x38] sm:$0xff]
    %v141 = vld [vmem:[#allocation7 + $0x40] sm:$0xff]
    %v142 = vld [vmem:[#allocation7 + $0x48] sm:$0xff]
    %v143 = vld [vmem:[#allocation7 + $0x50] sm:$0xff]
    %v144 = vld [vmem:[#allocation7 + $0x58] sm:$0xff]
    %v145 = vld [vmem:[#allocation7 + $0x60] sm:$0xff]
    %v146 = vld [vmem:[#allocation7 + $0x68] sm:$0xff]
    %v147 = vld [vmem:[#allocation7 + $0x70] sm:$0xff]
    %v148 = vld [vmem:[#allocation7 + $0x78] sm:$0xff]
    %v149 = vld [vmem:[%s4] sm:$0x1]
    %v151 = vperm.slane %v149, 0
    %153 = vmatpush.msra.mxu0 %v148
    %154 = vmatpush.msra.mxu0 %v147
    %155 = vmatpush.msra.mxu0 %v146
    %156 = vmatpush.msra.mxu0 %v145
    %157 = vmatpush.msra.mxu0 %v144
    %158 = vmatpush.msra.mxu0 %v143
    %159 = vmatpush.msra.mxu0 %v142
    %160 = vmatpush.msra.mxu0 %v141
    %161 = vmatpush.msra.mxu0 %v140
    %162 = vmatpush.msra.mxu0 %v139
    %163 = vmatpush.msra.mxu0 %v138
    %164 = vmatpush.msra.mxu0 %v137
    %165 = vmatpush.msra.mxu0 %v136
    %166 = vmatpush.msra.mxu0 %v135
    %167 = vmatpush.msra.mxu0 %v134
    %168 = vmatpush.msra.mxu0 %v133
    %169 = vmatmul.f32.gmra.mxu0 %v132
    %v170 = vpop.f32.mrf.mxu0
    %v171 = vadd.f32 %v151, %v170
    %172 = vdwg.mxu0
    %v173 = vmul.f32 %v171, 0.5
    %v174 = vtanh.pop %v173
    %v175 = vmul.f32 %v174, 0.5
    %v176 = vadd.f32 %v175, 0.5
    %v177 = vld [vmem:[#allocation8] sm:$0xff]
    %v178 = vld [vmem:[#allocation8 + $0x8] sm:$0xff]
    %v179 = vld [vmem:[#allocation8 + $0x10] sm:$0xff]
    %v180 = vld [vmem:[#allocation8 + $0x18] sm:$0xff]
    %v181 = vld [vmem:[#allocation8 + $0x20] sm:$0xff]
    %v182 = vld [vmem:[#allocation8 + $0x28] sm:$0xff]
    %v183 = vld [vmem:[#allocation8 + $0x30] sm:$0xff]
    %v184 = vld [vmem:[#allocation8 + $0x38] sm:$0xff]
    %v185 = vld [vmem:[#allocation8 + $0x40] sm:$0xff]
    %v186 = vld [vmem:[#allocation8 + $0x48] sm:$0xff]
    %v187 = vld [vmem:[#allocation8 + $0x50] sm:$0xff]
    %v188 = vld [vmem:[#allocation8 + $0x58] sm:$0xff]
    %v189 = vld [vmem:[#allocation8 + $0x60] sm:$0xff]
    %v190 = vld [vmem:[#allocation8 + $0x68] sm:$0xff]
    %v191 = vld [vmem:[#allocation8 + $0x70] sm:$0xff]
    %v192 = vld [vmem:[#allocation8 + $0x78] sm:$0xff]
    %v193 = vld [vmem:[%s6] sm:$0x1]
    %v195 = vperm.slane %v193, 0
    %197 = vmatpush.msra.mxu0 %v192
    %198 = vmatpush.msra.mxu0 %v191
    %199 = vmatpush.msra.mxu0 %v190
    %200 = vmatpush.msra.mxu0 %v189
    %201 = vmatpush.msra.mxu0 %v188
    %202 = vmatpush.msra.mxu0 %v187
    %203 = vmatpush.msra.mxu0 %v186
    %204 = vmatpush.msra.mxu0 %v185
    %205 = vmatpush.msra.mxu0 %v184
    %206 = vmatpush.msra.mxu0 %v183
    %207 = vmatpush.msra.mxu0 %v182
    %208 = vmatpush.msra.mxu0 %v181
    %209 = vmatpush.msra.mxu0 %v180
    %210 = vmatpush.msra.mxu0 %v179
    %211 = vmatpush.msra.mxu0 %v178
    %212 = vmatpush.msra.mxu0 %v177
    %213 = vmatmul.f32.gmra.mxu0 %v176
    %v214 = vpop.f32.mrf.mxu0
    %v215 = vadd.f32 %v195, %v214
    %216 = vdwg.mxu0
    %v217 = vmul.f32 %v215, 0.5
    %v218 = vtanh.pop %v217
    %v219 = vmul.f32 %v218, 0.5
    %v220 = vadd.f32 %v219, 0.5
    %221 = vst [vmem:[#allocation10] sm:$0xff] %v220
    // Predicated region
    $region46: #{tpu_custom_call.1} parent=1 // pred_check
      _
    $region47: #{tpu_custom_call.1} parent=1 // pred_check_branch
      %223 = sbr.rel (0) target = $region49
    $region48: #{tpu_custom_call.1} parent=1 // pred_region
      %225 = vsyncadd [#allocation4], 0
      %s227 = sshll.u32 [#allocation10], 4
      %s228 = int_to_ptr.vmem [resolvable:$true] %s227
      %s229 = sshll.u32 %s7, 4
      %s230 = int_to_ptr.hbm [resolvable:$true] %s229
      %232 = dma.vmem_to_hbm [thread:$0]  %s228, 128, %s230, [#allocation4]
    $region49: #{tpu_custom_call.1} parent=1 // pred_fallthru
      _
    // Predicated region
    $region50: #{tpu_custom_call.1} parent=1 // pred_check
      _
    $region51: #{tpu_custom_call.1} parent=1 // pred_check_branch
      %234 = sbr.rel (0) target = $region53
    $region52: #{tpu_custom_call.1} parent=1 // pred_region
      %236 = dma.done [#allocation4], 128
    $region53: #{tpu_custom_call.1} parent=1 // pred_fallthru
      _
    %237 = vsyncpa [#allocation3], 1
    %238 = vsyncpa [#allocation6], 1
    %239 = vsyncpa [#allocation9], 1
    %240 = vsyncpa [#allocation4], 1

</llo_original>
